<compile_context>
chip_gen: v5e
topology: v5e:2x2
jax: 0.10.0
libtpu: 0.0.40
codegen_flags: <defaults>
</compile_context>

<pallas_src>
import jax
import jax.numpy as jnp
from jax.experimental import pallas as pl
from jax.experimental.pallas import tpu as pltpu


def _conv_bn_silu_kernel(cols_ref, w_ref, bias_ref, o_ref):
    """Single-invocation fused Conv+BN+SiLU.

    cols_ref: (K*K*Cin, N*H*W)  bf16 im2col patches (all images)
    w_ref:    (Cout, K*K*Cin)   bf16 BN-scale-folded weights
    bias_ref: (Cout, 1)         f32 folded BN bias = beta - mean * scale
    o_ref:    (Cout, N*H*W)     lane-dense f32 output slab
    """
    # One MXU matmul covering all taps, channels and batch images.
    # bf16 operands, f32 accumulation.
    z = jnp.dot(w_ref[...], cols_ref[...],
                preferred_element_type=jnp.float32)          # (Cout, N*HW) f32
    z = z + bias_ref[...]                                     # broadcast bias
    # SiLU: z * sigmoid(z); exp + reciprocal both go to the EUP slot.
    y = z * pl.reciprocal(1.0 + jnp.exp(-z), approx=True)
    o_ref[...] = y.astype(o_ref.dtype)


def conv_bn_silu(x_nchw, w_oihw, gamma, beta, running_mean, running_var,
                 *, padding=1, eps=1e-5):
    """Conv2d(bias=False, stride=1, groups=1, dilation=1) + BN(eval) + SiLU."""
    N, Cin, H, W = x_nchw.shape
    Cout, _, K, _ = w_oihw.shape
    p = padding
    HW = H * W
    NHW = N * HW
    KKC = K * K * Cin

    # ---- plain-JAX glue: BN folding + weight reshape ----------------------
    scale = (gamma / jnp.sqrt(running_var + eps)).astype(jnp.float32)   # (Cout,)
    bias = (beta - running_mean * scale).astype(jnp.float32)            # (Cout,)
    # OIHW -> (Cout, K, K, Cin) -> (Cout, K*K*Cin), BN scale folded in.
    w_folded = (jnp.transpose(w_oihw, (0, 2, 3, 1))
                .reshape(Cout, KKC).astype(jnp.float32)) * scale[:, None]
    w_bf16 = w_folded.astype(jnp.bfloat16)
    bias2d = bias.reshape(Cout, 1)

    # ---- wrapper-side im2col: (K*K*Cin, N*H*W) ----------------------------
    # Row index (kh*K + kw)*Cin + c matches w_folded's column layout;
    # column index is n*HW + h*W + w (batch folded into the lane dimension).
    x_pad = jnp.pad(x_nchw, ((0, 0), (0, 0), (p, p), (p, p)))
    taps = [x_pad[:, :, kh:kh + H, kw:kw + W]          # each (N, Cin, H, W)
            for kh in range(K) for kw in range(K)]
    cols = (jnp.stack(taps, axis=0)                    # (KK, N, Cin, H, W)
            .transpose(0, 2, 1, 3, 4)                  # (KK, Cin, N, H, W)
            .reshape(KKC, NHW)
            .astype(jnp.bfloat16))
    # TODO(synk): for production-sized layers, skip this K*K-expanded HBM
    # round-trip: pass x_pad directly, DMA a halo tile (Cin, tileH+K-1, W+2p)
    # into VMEM, and build the taps in-kernel; size the H*W tile against
    # v7x's 64 MiB VMEM and set vmem_limit_bytes explicitly.

    out = pl.pallas_call(
        _conv_bn_silu_kernel,
        out_shape=jax.ShapeDtypeStruct((Cout, NHW), jnp.float32),
        grid_spec=pltpu.PrefetchScalarGridSpec(
            num_scalar_prefetch=0,
            grid=(1,),
            in_specs=[
                pl.BlockSpec((KKC, NHW), lambda i: (0, 0)),
                pl.BlockSpec((Cout, KKC), lambda i: (0, 0)),
                pl.BlockSpec((Cout, 1), lambda i: (0, 0)),
            ],
            out_specs=pl.BlockSpec((Cout, NHW), lambda i: (0, 0)),
        ),
        compiler_params=pltpu.CompilerParams(
            dimension_semantics=("arbitrary",)),
    )(cols, w_bf16, bias2d)

    # (Cout, N*HW) -> (N, Cout, H, W); tiny wrapper-side transpose (8x512).
    return (out.reshape(Cout, N, H, W)
            .transpose(1, 0, 2, 3)
            .astype(x_nchw.dtype))


def _reference(x_nchw, w_oihw, gamma, beta, running_mean, running_var,
               *, padding=1, eps=1e-5):
    """Pure-JAX reference (lax conv) for correctness checking."""
    y = jax.lax.conv_general_dilated(
        x_nchw.astype(jnp.float32), w_oihw.astype(jnp.float32),
        window_strides=(1, 1), padding=[(padding, padding), (padding, padding)],
        dimension_numbers=("NCHW", "OIHW", "NCHW"))
    scale = gamma / jnp.sqrt(running_var + eps)
    bias = beta - running_mean * scale
    z = y * scale[None, :, None, None] + bias[None, :, None, None]
    return z * jax.nn.sigmoid(z)


if __name__ == "__main__":
    key = jax.random.PRNGKey(0)
    k_x, k_w, k_g, k_b, k_m, k_v = jax.random.split(key, 6)

    N, Cin, H, W = 2, 4, 16, 16
    Cout, K = 8, 3

    x = jax.random.normal(k_x, (N, Cin, H, W), dtype=jnp.float32)
    # Conv2d weight (OIHW), bias=False per the module.
    w = jax.random.normal(k_w, (Cout, Cin, K, K), dtype=jnp.float32) * 0.1
    # BatchNorm2d parameters (inference mode, deterministic synthetic values).
    gamma = 1.0 + 0.1 * jax.random.normal(k_g, (Cout,), dtype=jnp.float32)
    beta = 0.1 * jax.random.normal(k_b, (Cout,), dtype=jnp.float32)
    running_mean = 0.1 * jax.random.normal(k_m, (Cout,), dtype=jnp.float32)
    running_var = 0.5 + jnp.abs(jax.random.normal(k_v, (Cout,), dtype=jnp.float32))

    out = conv_bn_silu(x, w, gamma, beta, running_mean, running_var, padding=1)
    out = jax.block_until_ready(out)

    ref = _reference(x, w, gamma, beta, running_mean, running_var, padding=1)
    assert out.shape == (N, Cout, H, W)
    # bf16 matmul operands (f32 accumulation) -> loosened tolerance vs f32 ref.
    assert jnp.allclose(out, ref, atol=2e-2, rtol=2e-2), "mismatch vs reference"

    print("KERNEL_OK")
</pallas_src>

<mosaic_0001>
module attributes {stable_mosaic.version = 11 : i64} {
  func.func @_conv_bn_silu_kernel(%arg0: i32, %arg1: memref<36x512xbf16, #tpu.memory_space<vmem>>, %arg2: memref<8x36xbf16, #tpu.memory_space<vmem>>, %arg3: memref<8x1xf32, #tpu.memory_space<vmem>>, %arg4: memref<8x512xf32, #tpu.memory_space<vmem>>) attributes {dimension_semantics = [#tpu.dimension_semantics<arbitrary>], iteration_bounds = array<i64: 1>, scalar_prefetch = 0 : i64, scratch_operands = 0 : i64, tpu.core_type = #tpu.core_type<tc>, window_params = [{pipeline_mode = #tpu.pipeline_mode<synchronous>, transform_indices = @transform_0, window_bounds = array<i64: 36, 512>}, {pipeline_mode = #tpu.pipeline_mode<synchronous>, transform_indices = @transform_1, window_bounds = array<i64: 8, 36>}, {pipeline_mode = #tpu.pipeline_mode<synchronous>, transform_indices = @transform_2, window_bounds = array<i64: 8, 1>}, {pipeline_mode = #tpu.pipeline_mode<synchronous>, transform_indices = @transform_3, window_bounds = array<i64: 8, 512>}]} {
    %c0 = arith.constant 0 : index
    %c0_0 = arith.constant 0 : index
    %0 = vector.load %arg2[%c0, %c0_0] : memref<8x36xbf16, #tpu.memory_space<vmem>>, vector<8x36xbf16>
    %c0_1 = arith.constant 0 : index
    %c0_2 = arith.constant 0 : index
    %1 = vector.load %arg1[%c0_1, %c0_2] : memref<36x512xbf16, #tpu.memory_space<vmem>>, vector<36x512xbf16>
    %cst = arith.constant dense<0.000000e+00> : vector<8x512xf32>
    %2 = tpu.matmul %0, %1, %cst {dimension_numbers = #tpu.dot_dimension_numbers<[1], [0], [0], [1], [0, 0, 1, 1], [], []>} : vector<8x36xbf16>, vector<36x512xbf16>, vector<8x512xf32> -> vector<8x512xf32>
    %c0_3 = arith.constant 0 : index
    %c0_4 = arith.constant 0 : index
    %3 = vector.load %arg3[%c0_3, %c0_4] : memref<8x1xf32, #tpu.memory_space<vmem>>, vector<8x1xf32>
    %4 = vector.broadcast %3 : vector<8x1xf32> to vector<8x512xf32>
    %5 = arith.addf %2, %4 : vector<8x512xf32>
    %cst_5 = arith.constant 0.000000e+00 : f32
    %6 = vector.broadcast %cst_5 : f32 to vector<8x512xf32>
    %7 = arith.subf %6, %5 : vector<8x512xf32>
    %8 = math.exp %7 : vector<8x512xf32>
    %cst_6 = arith.constant 1.000000e+00 : f32
    %9 = vector.broadcast %cst_6 : f32 to vector<8x512xf32>
    %10 = arith.addf %9, %8 : vector<8x512xf32>
    %11 = tpu.reciprocal %10 {approx = true} : vector<8x512xf32> -> vector<8x512xf32>
    %12 = arith.mulf %5, %11 : vector<8x512xf32>
    %c0_7 = arith.constant 0 : index
    %c0_8 = arith.constant 0 : index
    %13 = vector.load %arg4[%c0_7, %c0_8] : memref<8x512xf32, #tpu.memory_space<vmem>>, vector<8x512xf32>
    tpu.vector_store %arg4[%c0_7, %c0_8], %12 {strides = array<i32>} : memref<8x512xf32, #tpu.memory_space<vmem>>, vector<8x512xf32>,
    return
  }
  func.func @transform_0(%arg0: i32) -> (i32, i32) {
    %c0_i32 = arith.constant 0 : i32
    %c0_i32_0 = arith.constant 0 : i32
    %c0_i32_1 = arith.constant 0 : i32
    return %c0_i32, %c0_i32_0 : i32, i32
  }
  func.func @transform_1(%arg0: i32) -> (i32, i32) {
    %c0_i32 = arith.constant 0 : i32
    %c0_i32_0 = arith.constant 0 : i32
    %c0_i32_1 = arith.constant 0 : i32
    return %c0_i32, %c0_i32_0 : i32, i32
  }
  func.func @transform_2(%arg0: i32) -> (i32, i32) {
    %c0_i32 = arith.constant 0 : i32
    %c0_i32_0 = arith.constant 0 : i32
    %c0_i32_1 = arith.constant 0 : i32
    return %c0_i32, %c0_i32_0 : i32, i32
  }
  func.func @transform_3(%arg0: i32) -> (i32, i32) {
    %c0_i32 = arith.constant 0 : i32
    %c0_i32_0 = arith.constant 0 : i32
    %c0_i32_1 = arith.constant 0 : i32
    return %c0_i32, %c0_i32_0 : i32, i32
  }
}

</mosaic_0001>

<llo_original>
// kernel: tpu_custom_call.1
$region0: #{tpu_custom_call.1}
  #allocation0 [shape = 'u32[]', space=smem, size = 0x4, offset = 0x4, fixed_abs, tag = 'smem constant byte address 0x4 - core index']
  #allocation1 [shape = 'u32[72,128]{1,0:T(1,128)}', space=vmem, size = 0x9000, scoped, tag = 'internal scratch']
  %s0 = inlined_call_operand.hbm [shape: bf16[36,512], index: 0, kind: input, shape index: {}]
  %s1 = inlined_call_operand.vmem [shape: bf16[8,36], index: 1, kind: input, shape index: {}]
  %s2 = inlined_call_operand.vmem [shape: f32[8,1], index: 2, kind: input, shape index: {}]
  %s3 = inlined_call_operand.hbm [shape: f32[8,512], index: 3, kind: output, shape index: {}]
  %s4 = sld [smem:[#allocation0]]
  $region26: #{tpu_custom_call.1} parent=0
    _
  %s6 = ssub.s32 1, %s4
  %s7 = scalar_select 0, %s6, %s4
  $region1: #{tpu_custom_call.1} parent=0
    #allocation2 [shape = 'u8[40960]{0}', space=vmem, size = 0xa000, scoped, tag = 'input window, operand 0, single buffered']
    #allocation3 [shape = 's32[1]{0}', space=sflag, size = 0x4, scoped, tag = 'scoped memory for tpu_custom_call.1']
    #allocation4 [shape = 's32[1]{0}', space=sflag, size = 0x4, scoped, tag = 'scoped memory for tpu_custom_call.1']
    #allocation5 [shape = 'u8[16384]{0}', space=vmem, size = 0x4000, scoped, tag = 'output window, operand 0, single buffered']
    %8 = vsyncpa [#allocation3], 0
    %9 = vsyncpa [#allocation4], 0
    // Predicated region
    $region2: #{tpu_custom_call.1} parent=1 // pred_check
      _
    $region3: #{tpu_custom_call.1} parent=1 // pred_check_branch
      %11 = sbr.rel (0) target = $region5
    $region4: #{tpu_custom_call.1} parent=1 // pred_region
      %13 = vsyncadd [#allocation3], 0
      %s14 = sshll.u32 %s0, 4
      %s15 = int_to_ptr.hbm [resolvable:$true] %s14
      %s16 = sshll.u32 [#allocation2], 4
      %s17 = int_to_ptr.vmem [resolvable:$true] %s16
      %22 = dma.hbm_to_vmem [thread:$0]  %s15, 1280, %s17, [#allocation3], 256, 256, 16
    $region5: #{tpu_custom_call.1} parent=1 // pred_fallthru
      _
    // Predicated region
    $region6: #{tpu_custom_call.1} parent=1 // pred_check
      _
    $region7: #{tpu_custom_call.1} parent=1 // pred_check_branch
      %24 = sbr.rel (0) target = $region9
    $region8: #{tpu_custom_call.1} parent=1 // pred_region
      _
    $region9: #{tpu_custom_call.1} parent=1 // pred_fallthru
      _
    // Predicated region
    $region10: #{tpu_custom_call.1} parent=1 // pred_check
      _
    $region11: #{tpu_custom_call.1} parent=1 // pred_check_branch
      %26 = sbr.rel (0) target = $region13
    $region12: #{tpu_custom_call.1} parent=1 // pred_region
      _
    $region13: #{tpu_custom_call.1} parent=1 // pred_fallthru
      _
    // Predicated region
    $region14: #{tpu_custom_call.1} parent=1 // pred_check
      _
    $region15: #{tpu_custom_call.1} parent=1 // pred_check_branch
      %28 = sbr.rel (0) target = $region17
    $region16: #{tpu_custom_call.1} parent=1 // pred_region
      %30 = dma.done [#allocation3], 1280
    $region17: #{tpu_custom_call.1} parent=1 // pred_fallthru
      _
    %v32 = vld [vmem:[%s1] sm:$0xf]
    %v33 = vld [vmem:[#allocation2] sm:$0xff]
    %v34 = vld [vmem:[#allocation2 + $0x8] sm:$0xff]
    %v35 = vld [vmem:[#allocation2 + $0x10] sm:$0xff]
    %v36 = vld [vmem:[#allocation2 + $0x18] sm:$0xff]
    %v37 = vld [vmem:[#allocation2 + $0x20] sm:$0xff]
    %v38 = vld [vmem:[#allocation2 + $0x28] sm:$0xff]
    %v39 = vld [vmem:[#allocation2 + $0x30] sm:$0xff]
    %v40 = vld [vmem:[#allocation2 + $0x38] sm:$0xff]
    %v41 = vld [vmem:[#allocation2 + $0x40] sm:$0x33]
    %v42 = vld [vmem:[#allocation2 + $0x48] sm:$0x33]
    %v43 = vld [vmem:[%s2] sm:$0xff]
    %45 = vset.pattern.permute.xlu0 0
    %46 = vperm.xlu0 %45, %v43
    %v47 = vpop.permute.xlu0 %46
    %v59 = vunpack.c.l.b16 %v33
    %v60 = vunpack.c.h.b16 %v33
    %v61 = vunpack.c.l.b16 %v34
    %v62 = vunpack.c.h.b16 %v34
    %v63 = vunpack.c.l.b16 %v35
    %v64 = vunpack.c.h.b16 %v35
    %v65 = vunpack.c.l.b16 %v36
    %v66 = vunpack.c.h.b16 %v36
    %v67 = vunpack.c.l.b16 %v37
    %v68 = vunpack.c.h.b16 %v37
    %v69 = vunpack.c.l.b16 %v38
    %v70 = vunpack.c.h.b16 %v38
    %v71 = vunpack.c.l.b16 %v39
    %v72 = vunpack.c.h.b16 %v39
    %v73 = vunpack.c.l.b16 %v40
    %v74 = vunpack.c.h.b16 %v40
    %v75 = vunpack.c.l.b16 %v41
    %v76 = vunpack.c.h.b16 %v41
    %v77 = vunpack.c.l.b16 %v42
    %v78 = vunpack.c.h.b16 %v42
    %v79 = vpack.c.b16 %v63, %v59
    %v80 = vpack.c.b16 %v64, %v60
    %v81 = vpack.c.b16 %v65, %v61
    %v82 = vpack.c.b16 %v66, %v62
    %v83 = vpack.c.b16 %v71, %v67
    %v84 = vpack.c.b16 %v72, %v68
    %v85 = vpack.c.b16 %v73, %v69
    %v86 = vpack.c.b16 %v74, %v70
    %v87 = vpack.c.b16 %v75, %v75
    %v88 = vpack.c.b16 %v76, %v76
    %v89 = vpack.c.b16 %v77, %v77
    %v90 = vpack.c.b16 %v78, %v78
    %vm99 = vcmask 293888
    %v101 = vsel %vm99, %v32, 0
    %vm103 = vcmask 1041408
    %v105 = vsel %vm103, %v87, 0
    %v108 = vsel %vm103, %v88, 0
    %v111 = vsel %vm103, %v89, 0
    %v114 = vsel %vm103, %v90, 0
    %116 = vmatpush.bf16.msra.mxu0 0
    %117 = vmatpush.bf16.msra.mxu0 0
    %118 = vmatpush.bf16.msra.mxu0 0
    %119 = vmatpush.bf16.msra.mxu0 0
    %120 = vmatpush.bf16.msra.mxu0 0
    %121 = vmatpush.bf16.msra.mxu0 %v105
    %122 = vmatpush.bf16.msra.mxu0 %v83
    %123 = vmatpush.bf16.msra.mxu0 %v79
    %124 = vmatmul.bf16.gmra.mxu0 %v101
    %v125 = vpop.f32.mrf.mxu0
    %v126 = vadd.f32 %v47, %v125
    %v127 = vpop.f32.mrf.mxu0
    %128 = vdwg.mxu0
    %129 = vmatpush.bf16.msra.mxu0 0
    %130 = vmatpush.bf16.msra.mxu0 0
    %131 = vmatpush.bf16.msra.mxu0 0
    %132 = vmatpush.bf16.msra.mxu0 0
    %133 = vmatpush.bf16.msra.mxu0 0
    %134 = vmatpush.bf16.msra.mxu0 %v108
    %135 = vmatpush.bf16.msra.mxu0 %v84
    %136 = vmatpush.bf16.msra.mxu0 %v80
    %137 = vmatmul.bf16.gmra.mxu0 %v101
    %v138 = vpop.f32.mrf.mxu0
    %v139 = vadd.f32 %v47, %v138
    %v140 = vpop.f32.mrf.mxu0
    %141 = vdwg.mxu0
    %142 = vmatpush.bf16.msra.mxu0 0
    %143 = vmatpush.bf16.msra.mxu0 0
    %144 = vmatpush.bf16.msra.mxu0 0
    %145 = vmatpush.bf16.msra.mxu0 0
    %146 = vmatpush.bf16.msra.mxu0 0
    %147 = vmatpush.bf16.msra.mxu0 %v111
    %148 = vmatpush.bf16.msra.mxu0 %v85
    %149 = vmatpush.bf16.msra.mxu0 %v81
    %150 = vmatmul.bf16.gmra.mxu0 %v101
    %v151 = vpop.f32.mrf.mxu0
    %v152 = vadd.f32 %v47, %v151
    %v153 = vpop.f32.mrf.mxu0
    %154 = vdwg.mxu0
    %155 = vmatpush.bf16.msra.mxu0 0
    %156 = vmatpush.bf16.msra.mxu0 0
    %157 = vmatpush.bf16.msra.mxu0 0
    %158 = vmatpush.bf16.msra.mxu0 0
    %159 = vmatpush.bf16.msra.mxu0 0
    %160 = vmatpush.bf16.msra.mxu0 %v114
    %161 = vmatpush.bf16.msra.mxu0 %v86
    %162 = vmatpush.bf16.msra.mxu0 %v82
    %163 = vmatmul.bf16.gmra.mxu0 %v101
    %v164 = vpop.f32.mrf.mxu0
    %v165 = vadd.f32 %v47, %v164
    %v166 = vpop.f32.mrf.mxu0
    %167 = vdwg.mxu0
    %v168 = vsub.f32 0.0, %v126
    %v169 = vsub.f32 0.0, %v139
    %v170 = vsub.f32 0.0, %v152
    %v171 = vsub.f32 0.0, %v165
    %v172 = vmul.f32 %v168, 1.442695
    %v173 = vpow.pop %v172
    %v174 = vmul.f32 %v169, 1.442695
    %v175 = vpow.pop %v174
    %v176 = vmul.f32 %v170, 1.442695
    %v177 = vpow.pop %v176
    %v178 = vmul.f32 %v171, 1.442695
    %v179 = vpow.pop %v178
    %v180 = vadd.f32 %v173, 1.0
    %v181 = vadd.f32 %v175, 1.0
    %v182 = vadd.f32 %v177, 1.0
    %v183 = vadd.f32 %v179, 1.0
    %v184 = vrcp.pop %v180
    %v185 = vrcp.pop %v181
    %v186 = vrcp.pop %v182
    %v187 = vrcp.pop %v183
    %v188 = vmul.f32 %v126, %v184
    %v189 = vmul.f32 %v139, %v185
    %v190 = vmul.f32 %v152, %v186
    %v191 = vmul.f32 %v165, %v187
    %192 = vst [vmem:[#allocation5] sm:$0xff] %v188
    %193 = vst [vmem:[#allocation5 + $0x8] sm:$0xff] %v189
    %194 = vst [vmem:[#allocation5 + $0x10] sm:$0xff] %v190
    %195 = vst [vmem:[#allocation5 + $0x18] sm:$0xff] %v191
    // Predicated region
    $region18: #{tpu_custom_call.1} parent=1 // pred_check
      _
    $region19: #{tpu_custom_call.1} parent=1 // pred_check_branch
      %197 = sbr.rel (0) target = $region21
    $region20: #{tpu_custom_call.1} parent=1 // pred_region
      %199 = vsyncadd [#allocation4], 0
      %s201 = sshll.u32 [#allocation5], 4
      %s202 = int_to_ptr.vmem [resolvable:$true] %s201
      %s203 = sshll.u32 %s3, 4
      %s204 = int_to_ptr.hbm [resolvable:$true] %s203
      %206 = dma.vmem_to_hbm [thread:$0]  %s202, 512, %s204, [#allocation4]
    $region21: #{tpu_custom_call.1} parent=1 // pred_fallthru
      _
    // Predicated region
    $region22: #{tpu_custom_call.1} parent=1 // pred_check
      _
    $region23: #{tpu_custom_call.1} parent=1 // pred_check_branch
      %208 = sbr.rel (0) target = $region25
    $region24: #{tpu_custom_call.1} parent=1 // pred_region
      %210 = dma.done [#allocation4], 512
    $region25: #{tpu_custom_call.1} parent=1 // pred_fallthru
      _
    %211 = vsyncpa [#allocation3], 1
    %212 = vsyncpa [#allocation4], 1

</llo_original>
